<compile_context>
chip_gen: v7x
topology: tpu7x:2x2x1
jax: 0.10.0
libtpu: 0.0.40
codegen_flags: <defaults>
</compile_context>

<pallas_src>
import jax
import jax.numpy as jnp
from jax.experimental import pallas as pl
from jax.experimental.pallas import tpu as pltpu

T = 4            # time_window
DECAY = 0.25     # decay
THRESH = 0.5     # thresh
BN_EPS = 1e-5    # nn.BatchNorm1d default eps

_VMEM_LIMIT_CACHE = None


def _default_vmem_limit():
    """Per-generation scoped-VMEM limit: ~3/4 of physical VMEM, capped."""
    global _VMEM_LIMIT_CACHE
    if _VMEM_LIMIT_CACHE is None:
        try:
            cap = int(getattr(pltpu.get_tpu_info(), "vmem_capacity_bytes", 0))
        except Exception:
            cap = 0
        if cap <= 0:
            cap = 64 * 1024 * 1024            # conservative (v7x-sized) fallback
        _VMEM_LIMIT_CACHE = int(min(cap - cap // 4, 112 * 1024 * 1024))
    return _VMEM_LIMIT_CACHE


def _fit_rows(budget_bytes, bytes_per_row, lo=8, hi=1024):
    r = int(budget_bytes) // max(int(bytes_per_row), 1)
    return max(lo, min(hi, r))


def _pick_tile(n, target):
    """Largest (8,128)-legal row tile dividing n, <= target.

    Preference: multiple of 128 with even grid count (v7x megacore balance)
    > multiple of 128 > multiple of 16 > multiple of 8 > full extent."""
    n = int(n)
    target = max(8, min(int(target), n))
    if n <= target:
        return n
    best = {}
    for cand in range(target, 7, -1):
        if n % cand:
            continue
        if cand % 128 == 0:
            key = "a" if (n // cand) % 2 == 0 else "b"
        elif cand % 16 == 0:
            key = "c"
        elif cand % 8 == 0:
            key = "d"
        else:
            continue
        best.setdefault(key, cand)
        if "a" in best:
            break
    for key in ("a", "b", "c", "d"):
        if key in best:
            return best[key]
    return n   # no legal divisor: full-extent single block (always legal)


def _ceil_to(n, m=128):
    return ((n + m - 1) // m) * m


def _pad_cols(a, cols):
    if a.shape[-1] == cols:
        return a
    pad = [(0, 0)] * (a.ndim - 1) + [(0, cols - a.shape[-1])]
    return jnp.pad(a, pad)


def _pad_mat(w, rows, cols):
    if w.shape == (rows, cols):
        return w
    return jnp.pad(w, ((0, rows - w.shape[0]), (0, cols - w.shape[1])))


# ---------------------------------------------------------------------------
# Kernel 1: BN1 batch statistics of y1 = x @ W1 (y1 is discarded, not stored).
# Per-tile sum and tile-centered second moment; combined with Chan's formula
# in plain JAX.  Grid axis is "parallel" (megacore-shardable).
# ---------------------------------------------------------------------------
def _fc1_stats_kernel(x_ref, w1_ref, sum_ref, m2_ref):
    tm = x_ref.shape[0]
    y1 = jnp.dot(x_ref[...], w1_ref[...], preferred_element_type=jnp.float32)
    s = jnp.sum(y1, axis=0, keepdims=True)              # (1, Hp)
    d = y1 - s * (1.0 / tm)                              # tile-centered
    sum_ref[...] = s[None]
    m2_ref[...] = jnp.sum(d * d, axis=0, keepdims=True)[None]


def fc1_bn_stats(x2d, w1, vmem_limit):
    M, Cp = x2d.shape
    Hp = w1.shape[1]
    # VMEM: 2 x-buffers (bf16) + 2 w1 buffers (bf16) + in-kernel y1/d (fp32).
    budget = max(vmem_limit // 2 - 4 * Cp * Hp, 1 << 20)
    tm = _pick_tile(M, _fit_rows(budget, 4 * Cp + 8 * Hp, hi=1024))
    G = M // tm
    psum, pm2 = pl.pallas_call(
        _fc1_stats_kernel,
        out_shape=(jax.ShapeDtypeStruct((G, 1, Hp), jnp.float32),
                   jax.ShapeDtypeStruct((G, 1, Hp), jnp.float32)),
        grid_spec=pltpu.PrefetchScalarGridSpec(
            num_scalar_prefetch=0,
            grid=(G,),
            in_specs=[pl.BlockSpec((tm, Cp), lambda i: (i, 0)),
                      pl.BlockSpec((Cp, Hp), lambda i: (0, 0))],
            out_specs=[pl.BlockSpec((1, 1, Hp), lambda i: (i, 0, 0)),
                       pl.BlockSpec((1, 1, Hp), lambda i: (i, 0, 0))]),
        compiler_params=pltpu.CompilerParams(
            dimension_semantics=("parallel",),
            vmem_limit_bytes=vmem_limit),
    )(x2d, w1)
    return psum, pm2, tm


# ---------------------------------------------------------------------------
# Kernel 2 (fused): recompute y1 = x @ W1, BN1 affine, fc1_lif recurrence over
# the T time steps (state in registers, spikes staged in a VMEM scratch), one
# big fc2_linear matmul over all T*tile rows, bf16 y2 output + BN2 partials.
# Neither y1 nor the spikes ever touch HBM.
# ---------------------------------------------------------------------------
def _fc1_fused_kernel(x_ref, w1_ref, scale_ref, shift_ref, w2_ref,
                      y2_ref, sum_ref, m2_ref, sp_ref):
    Tt, tms, _ = x_ref.shape
    rows = Tt * tms

    w1 = w1_ref[...]
    scale = scale_ref[...]        # (1, Hp)
    shift = shift_ref[...]        # (1, Hp)

    mem = None
    spike = None
    for t in range(Tt):
        y1_t = jnp.dot(x_ref[t], w1, preferred_element_type=jnp.float32)
        xt = y1_t * scale + shift
        mem = xt if t == 0 else mem * (DECAY * (1.0 - spike)) + xt
        spike = (mem > THRESH).astype(jnp.float32)
        sp_ref[pl.ds(t * tms, tms), :] = spike

    # Single (T*tms, Hp) x (Hp, Coutp) matmul for fc2_linear (better MXU fill).
    y2 = jnp.dot(sp_ref[...].astype(jnp.bfloat16), w2_ref[...],
                 preferred_element_type=jnp.float32)     # (rows, Coutp)

    # BN2 statistics on the bf16-rounded values K3 will actually read.
    y2q = y2.astype(jnp.bfloat16).astype(jnp.float32)
    s = jnp.sum(y2q, axis=0, keepdims=True)
    d = y2q - s * (1.0 / rows)
    sum_ref[...] = s[None]
    m2_ref[...] = jnp.sum(d * d, axis=0, keepdims=True)[None]

    for t in range(Tt):
        y2_ref[t] = y2q[t * tms:(t + 1) * tms, :].astype(jnp.bfloat16)


def fc1_fused(x_t, w1, scale1, shift1, w2, vmem_limit):
    Tt, Mt, Cp = x_t.shape
    Hp = w1.shape[1]
    Coutp = w2.shape[1]
    weights = 4 * (Cp * Hp + Hp * Coutp)                  # double-buffered bf16
    per_row = Tt * (4 * Cp + 6 * Hp + 16 * Coutp) + 16 * Hp
    budget = max(vmem_limit // 2 - weights, 1 << 20)
    tms = _pick_tile(Mt, _fit_rows(budget, per_row, hi=512))
    G = Mt // tms
    y2, psum, pm2 = pl.pallas_call(
        _fc1_fused_kernel,
        out_shape=(jax.ShapeDtypeStruct((Tt, Mt, Coutp), jnp.bfloat16),
                   jax.ShapeDtypeStruct((G, 1, Coutp), jnp.float32),
                   jax.ShapeDtypeStruct((G, 1, Coutp), jnp.float32)),
        grid_spec=pltpu.PrefetchScalarGridSpec(
            num_scalar_prefetch=0,
            grid=(G,),
            in_specs=[pl.BlockSpec((Tt, tms, Cp), lambda i: (0, i, 0)),
                      pl.BlockSpec((Cp, Hp), lambda i: (0, 0)),
                      pl.BlockSpec((1, Hp), lambda i: (0, 0)),
                      pl.BlockSpec((1, Hp), lambda i: (0, 0)),
                      pl.BlockSpec((Hp, Coutp), lambda i: (0, 0))],
            out_specs=[pl.BlockSpec((Tt, tms, Coutp), lambda i: (0, i, 0)),
                       pl.BlockSpec((1, 1, Coutp), lambda i: (i, 0, 0)),
                       pl.BlockSpec((1, 1, Coutp), lambda i: (i, 0, 0))],
            scratch_shapes=[pltpu.VMEM((Tt * tms, Hp), jnp.float32)]),
        compiler_params=pltpu.CompilerParams(
            dimension_semantics=("parallel",),
            vmem_limit_bytes=vmem_limit),
    )(x_t, w1, scale1, shift1, w2)
    return y2, psum, pm2, Tt * tms


# ---------------------------------------------------------------------------
# Kernel 3: BN2 affine + fc2_lif -> output spikes.  Memory bound; bf16 input,
# tile size derived from the per-generation VMEM budget.
# ---------------------------------------------------------------------------
def _bn_lif_kernel(y_ref, scale_ref, shift_ref, o_ref):
    scale = scale_ref[...]
    shift = shift_ref[...]
    mem = None
    spike = None
    for t in range(y_ref.shape[0]):
        xt = y_ref[t].astype(jnp.float32) * scale + shift
        mem = xt if t == 0 else mem * (DECAY * (1.0 - spike)) + xt
        spike = (mem > THRESH).astype(jnp.float32)
        o_ref[t] = spike.astype(o_ref.dtype)


def bn_lif(y_t, scale, shift, vmem_limit, out_dtype=jnp.float32):
    Tt, Mt, Fp = y_t.shape
    in_b = jnp.dtype(y_t.dtype).itemsize
    out_b = jnp.dtype(out_dtype).itemsize
    per_row = Tt * (2 * in_b * Fp + 2 * out_b * Fp + 12 * Fp)
    tms = _pick_tile(Mt, _fit_rows(vmem_limit // 2, per_row, hi=1024))
    return pl.pallas_call(
        _bn_lif_kernel,
        out_shape=jax.ShapeDtypeStruct((Tt, Mt, Fp), out_dtype),
        grid_spec=pltpu.PrefetchScalarGridSpec(
            num_scalar_prefetch=0,
            grid=(Mt // tms,),
            in_specs=[pl.BlockSpec((Tt, tms, Fp), lambda i: (0, i, 0)),
                      pl.BlockSpec((1, Fp), lambda i: (0, 0)),
                      pl.BlockSpec((1, Fp), lambda i: (0, 0))],
            out_specs=pl.BlockSpec((Tt, tms, Fp), lambda i: (0, i, 0))),
        compiler_params=pltpu.CompilerParams(
            dimension_semantics=("parallel",),
            vmem_limit_bytes=vmem_limit),
    )(y_t, scale, shift)


# ---------------------------------------------------------------------------
# Glue: combine per-tile partials (Chan's parallel variance) -> BN scale/shift
# ---------------------------------------------------------------------------
def _bn_affine(psum, pm2, rows_per_tile, gamma, beta, total_rows):
    total = jnp.sum(psum, axis=0)                         # (1, F)
    mean = total / total_rows
    tile_mean = psum / rows_per_tile                      # (G, 1, F)
    m2 = (jnp.sum(pm2, axis=0)
          + rows_per_tile * jnp.sum((tile_mean - mean[None]) ** 2, axis=0))
    var = jnp.maximum(m2 / total_rows, 0.0)               # biased (training BN)
    scale = gamma / jnp.sqrt(var + BN_EPS)
    shift = beta - mean * scale
    return scale.astype(jnp.float32), shift.astype(jnp.float32)


def mlp_forward(x, params, out_dtype=jnp.float32):
    B_, N, C = x.shape
    assert B_ % T == 0, "leading dim must be T * batch"
    B = B_ // T
    M = B_ * N                 # total BatchNorm sample count
    Mt = B * N                 # rows per time step

    w1 = params["w1"]
    w2 = params["w2"]
    H = w1.shape[1]
    Cout = w2.shape[1]
    Cp, Hp, Coutp = _ceil_to(C), _ceil_to(H), _ceil_to(Cout)

    # Cast + lane-pad once (single fused XLA op each).  bf16 MXU operands,
    # fp32 accumulation; padded channels are exact zeros end-to-end.
    x_p = _pad_cols(x.astype(jnp.bfloat16).reshape(M, C), Cp)
    w1_p = _pad_mat(w1.astype(jnp.bfloat16), Cp, Hp)
    w2_p = _pad_mat(w2.astype(jnp.bfloat16), Hp, Coutp)
    g1 = _pad_cols(params["gamma1"].astype(jnp.float32).reshape(1, H), Hp)
    b1 = _pad_cols(params["beta1"].astype(jnp.float32).reshape(1, H), Hp)
    g2 = _pad_cols(params["gamma2"].astype(jnp.float32).reshape(1, Cout), Coutp)
    b2 = _pad_cols(params["beta2"].astype(jnp.float32).reshape(1, Cout), Coutp)

    vmem = _default_vmem_limit()

    # K1: BN1 batch statistics (fc1 output never stored to HBM).
    s1, m2_1, tm1 = fc1_bn_stats(x_p, w1_p, vmem)
    scale1, shift1 = _bn_affine(s1, m2_1, tm1, g1, b1, M)

    # K2: fc1 recompute + fc1_bn + fc1_lif + fc2_linear + BN2 partial stats.
    y2, s2, m2_2, rows2 = fc1_fused(x_p.reshape(T, Mt, Cp), w1_p,
                                    scale1, shift1, w2_p, vmem)
    scale2, shift2 = _bn_affine(s2, m2_2, rows2, g2, b2, M)

    # K3: fc2_bn normalize + fc2_lif -> output spikes.
    sp = bn_lif(y2, scale2, shift2, vmem, out_dtype)

    out = sp.reshape(B_, N, Coutp)
    return out if Coutp == Cout else out[..., :Cout]


if __name__ == "__main__":
    key = jax.random.PRNGKey(0)
    B, N, C, H = 2, 8, 16, 32        # in_features=C, hidden_features=H, out=C
    B_ = T * B

    k1, k2, kx = jax.random.split(key, 3)
    bound1 = 1.0 / (C ** 0.5)
    bound2 = 1.0 / (H ** 0.5)
    params = dict(
        # weights stored transposed (in_features, out_features) for y = x @ W.
        # Linear biases are omitted: training-mode BatchNorm with batch stats
        # exactly cancels any per-channel bias, so the forward output is equal.
        w1=jax.random.uniform(k1, (C, H), jnp.float32, -bound1, bound1),
        gamma1=jnp.ones((H,), jnp.float32),
        beta1=jnp.zeros((H,), jnp.float32),
        w2=jax.random.uniform(k2, (H, C), jnp.float32, -bound2, bound2),
        gamma2=jnp.ones((C,), jnp.float32),
        beta2=jnp.zeros((C,), jnp.float32),
    )

    x = jax.random.normal(kx, (B_, N, C), jnp.float32)
    out = mlp_forward(x, params)
    jax.block_until_ready(out)
    assert out.shape == (B_, N, C)
    # output must be spikes (exactly 0/1) with a sane, non-degenerate rate
    assert bool(jnp.all((out == 0.0) | (out == 1.0)))
    frac = float(out.mean())
    assert 0.0 < frac < 1.0
    print("KERNEL_OK")
</pallas_src>

<mosaic_0001>
module attributes {stable_mosaic.version = 11 : i64} {
  func.func @_fc1_stats_kernel(%arg0: i32, %arg1: memref<64x128xbf16, #tpu.memory_space<vmem>>, %arg2: memref<128x128xbf16, #tpu.memory_space<vmem>>, %arg3: memref<1x1x128xf32, #tpu.memory_space<vmem>>, %arg4: memref<1x1x128xf32, #tpu.memory_space<vmem>>) attributes {dimension_semantics = [#tpu.dimension_semantics<parallel>], iteration_bounds = array<i64: 1>, scalar_prefetch = 0 : i64, scratch_operands = 0 : i64, tpu.core_type = #tpu.core_type<tc>, window_params = [{transform_indices = @transform_0, window_bounds = array<i64: 64, 128>}, {pipeline_mode = #tpu.pipeline_mode<synchronous>, transform_indices = @transform_1, window_bounds = array<i64: 128, 128>}, {transform_indices = @transform_2, window_bounds = array<i64: 1, 1, 128>}, {transform_indices = @transform_3, window_bounds = array<i64: 1, 1, 128>}]} {
    %c0 = arith.constant 0 : index
    %c0_0 = arith.constant 0 : index
    %0 = vector.load %arg1[%c0, %c0_0] : memref<64x128xbf16, #tpu.memory_space<vmem>>, vector<64x128xbf16>
    %c0_1 = arith.constant 0 : index
    %c0_2 = arith.constant 0 : index
    %1 = vector.load %arg2[%c0_1, %c0_2] : memref<128x128xbf16, #tpu.memory_space<vmem>>, vector<128x128xbf16>
    %cst = arith.constant dense<0.000000e+00> : vector<64x128xf32>
    %2 = tpu.matmul %0, %1, %cst {dimension_numbers = #tpu.dot_dimension_numbers<[1], [0], [0], [1], [0, 0, 1, 1], [], []>} : vector<64x128xbf16>, vector<128x128xbf16>, vector<64x128xf32> -> vector<64x128xf32>
    %cst_3 = arith.constant dense<0.000000e+00> : vector<128xf32>
    %3 = vector.multi_reduction <add>, %2, %cst_3 [0] : vector<64x128xf32> to vector<128xf32>
    %4 = vector.shape_cast %3 : vector<128xf32> to vector<1x128xf32>
    %cst_4 = arith.constant 1.562500e-02 : f32
    %5 = vector.broadcast %cst_4 : f32 to vector<1x128xf32>
    %6 = arith.mulf %4, %5 : vector<1x128xf32>
    %7 = vector.broadcast %6 : vector<1x128xf32> to vector<64x128xf32>
    %8 = arith.subf %2, %7 : vector<64x128xf32>
    %9 = vector.shape_cast %4 : vector<1x128xf32> to vector<1x1x128xf32>
    %c0_5 = arith.constant 0 : index
    %c0_6 = arith.constant 0 : index
    %c0_7 = arith.constant 0 : index
    %10 = vector.load %arg3[%c0_5, %c0_6, %c0_7] : memref<1x1x128xf32, #tpu.memory_space<vmem>>, vector<1x1x128xf32>
    tpu.vector_store %arg3[%c0_5, %c0_6, %c0_7], %9 {strides = array<i32>} : memref<1x1x128xf32, #tpu.memory_space<vmem>>, vector<1x1x128xf32>,
    %11 = arith.mulf %8, %8 : vector<64x128xf32>
    %cst_8 = arith.constant dense<0.000000e+00> : vector<128xf32>
    %12 = vector.multi_reduction <add>, %11, %cst_8 [0] : vector<64x128xf32> to vector<128xf32>
    %13 = vector.shape_cast %12 : vector<128xf32> to vector<1x128xf32>
    %14 = vector.shape_cast %13 : vector<1x128xf32> to vector<1x1x128xf32>
    %c0_9 = arith.constant 0 : index
    %c0_10 = arith.constant 0 : index
    %c0_11 = arith.constant 0 : index
    %15 = vector.load %arg4[%c0_9, %c0_10, %c0_11] : memref<1x1x128xf32, #tpu.memory_space<vmem>>, vector<1x1x128xf32>
    tpu.vector_store %arg4[%c0_9, %c0_10, %c0_11], %14 {strides = array<i32>} : memref<1x1x128xf32, #tpu.memory_space<vmem>>, vector<1x1x128xf32>,
    return
  }
  func.func @transform_0(%arg0: i32) -> (i32, i32) {
    %c0_i32 = arith.constant 0 : i32
    %c0_i32_0 = arith.constant 0 : i32
    return %arg0, %c0_i32 : i32, i32
  }
  func.func @transform_1(%arg0: i32) -> (i32, i32) {
    %c0_i32 = arith.constant 0 : i32
    %c0_i32_0 = arith.constant 0 : i32
    %c0_i32_1 = arith.constant 0 : i32
    return %c0_i32, %c0_i32_0 : i32, i32
  }
  func.func @transform_2(%arg0: i32) -> (i32, i32, i32) {
    %c0_i32 = arith.constant 0 : i32
    %c0_i32_0 = arith.constant 0 : i32
    %c0_i32_1 = arith.constant 0 : i32
    return %arg0, %c0_i32, %c0_i32_0 : i32, i32, i32
  }
  func.func @transform_3(%arg0: i32) -> (i32, i32, i32) {
    %c0_i32 = arith.constant 0 : i32
    %c0_i32_0 = arith.constant 0 : i32
    %c0_i32_1 = arith.constant 0 : i32
    return %arg0, %c0_i32, %c0_i32_0 : i32, i32, i32
  }
}

</mosaic_0001>

<llo_original>
// kernel: tpu_custom_call.1
$region0: #{tpu_custom_call.1}
  #allocation0 [shape = 'u32[]', space=smem, size = 0x4, offset = 0x4, fixed_abs, tag = 'smem constant byte address 0x4 - core index']
  #allocation1 [shape = 'u32[144,128]{1,0:T(1,128)}', space=vmem, size = 0x12000, scoped, tag = 'internal scratch']
  %s0 = inlined_call_operand.hbm [shape: bf16[64,128], index: 0, kind: input, shape index: {}]
  %s1 = inlined_call_operand.hbm [shape: bf16[128,128], index: 1, kind: input, shape index: {}]
  %s2 = inlined_call_operand.hbm [shape: f32[1,1,128], index: 2, kind: output, shape index: {0}]
  %s3 = inlined_call_operand.hbm [shape: f32[1,1,128], index: 3, kind: output, shape index: {1}]
  %4 = xla_tuple %s2, %s3
  %s5 = sld [smem:[#allocation0]]
  $region34: #{tpu_custom_call.1} parent=0
    _
  %s7 = ssub.s32 1, %s5
  %s8 = scalar_select 0, %s7, %s5
  $region1: #{tpu_custom_call.1} parent=0
    #allocation2 [shape = 'u8[16384]{0}', space=vmem, size = 0x4000, scoped, tag = 'input window, operand 0, single buffered']
    #allocation3 [shape = 's32[1]{0}', space=sflag, size = 0x4, scoped, tag = 'scoped memory for tpu_custom_call.1']
    #allocation4 [shape = 's32[1]{0}', space=sflag, size = 0x4, scoped, tag = 'scoped memory for tpu_custom_call.1']
    #allocation5 [shape = 'u8[32768]{0}', space=vmem, size = 0x8000, scoped, tag = 'input window, operand 1, single buffered']
    #allocation6 [shape = 's32[1]{0}', space=sflag, size = 0x4, scoped, tag = 'scoped memory for tpu_custom_call.1']
    #allocation7 [shape = 'u8[512]{0}', space=vmem, size = 0x400, scoped, tag = 'output window, operand 0, single buffered']
    #allocation8 [shape = 'u8[512]{0}', space=vmem, size = 0x400, scoped, tag = 'output window, operand 1, single buffered']
    #allocation9 [shape = 's32[1]{0}', space=sflag, size = 0x4, scoped, tag = 'scoped memory for tpu_custom_call.1']
    %9 = vsyncpa [#allocation3], 0
    %10 = vsyncpa [#allocation6], 0
    %11 = vsyncpa [#allocation4], 0
    %12 = vsyncpa [#allocation9], 0
    // Predicated region
    $region2: #{tpu_custom_call.1} parent=1 // pred_check
      _
    $region3: #{tpu_custom_call.1} parent=1 // pred_check_branch
      %14 = sbr.rel (0) target = $region5
    $region4: #{tpu_custom_call.1} parent=1 // pred_region
      %s16 = ssub.s32 512, 512
      %17 = vsyncadd [#allocation3], %s16
      %s18 = sshll.u32 [#allocation2], 4
      %s19 = int_to_ptr.vmem [resolvable:$true] %s18
      %24 = dma.hbm_to_vmem [thread:$0]  %s0, 512, %s19, [#allocation3], 64, 64, 4
    $region5: #{tpu_custom_call.1} parent=1 // pred_fallthru
      _
    // Predicated region
    $region6: #{tpu_custom_call.1} parent=1 // pred_check
      _
    $region7: #{tpu_custom_call.1} parent=1 // pred_check_branch
      %26 = sbr.rel (0) target = $region9
    $region8: #{tpu_custom_call.1} parent=1 // pred_region
      %s28 = ssub.s32 1024, 1024
      %29 = vsyncadd [#allocation6], %s28
      %s30 = sshll.u32 [#allocation5], 4
      %s31 = int_to_ptr.vmem [resolvable:$true] %s30
      %36 = dma.hbm_to_vmem [thread:$0]  %s1, 1024, %s31, [#allocation6], 64, 64, 4
    $region9: #{tpu_custom_call.1} parent=1 // pred_fallthru
      _
    // Predicated region
    $region10: #{tpu_custom_call.1} parent=1 // pred_check
      _
    $region11: #{tpu_custom_call.1} parent=1 // pred_check_branch
      %38 = sbr.rel (0) target = $region13
    $region12: #{tpu_custom_call.1} parent=1 // pred_region
      %39 = dma.done [#allocation3], 512
    $region13: #{tpu_custom_call.1} parent=1 // pred_fallthru
      _
    // Predicated region
    $region14: #{tpu_custom_call.1} parent=1 // pred_check
      _
    $region15: #{tpu_custom_call.1} parent=1 // pred_check_branch
      %41 = sbr.rel (0) target = $region17
    $region16: #{tpu_custom_call.1} parent=1 // pred_region
      %42 = dma.done [#allocation6], 1024
    $region17: #{tpu_custom_call.1} parent=1 // pred_fallthru
      _
    %v44 = vld [vmem:[#allocation2] sm:$0xf]
    %v45 = vld [vmem:[#allocation2 + $0x4] sm:$0xf]
    %v46 = vld [vmem:[#allocation2 + $0x8] sm:$0xf]
    %v47 = vld [vmem:[#allocation2 + $0xc] sm:$0xf]
    %v48 = vld [vmem:[#allocation2 + $0x10] sm:$0xf]
    %v49 = vld [vmem:[#allocation2 + $0x14] sm:$0xf]
    %v50 = vld [vmem:[#allocation2 + $0x18] sm:$0xf]
    %v51 = vld [vmem:[#allocation2 + $0x1c] sm:$0xf]
    %v52 = vld [vmem:[#allocation5] sm:$0xf]
    %v53 = vld [vmem:[#allocation5 + $0x4] sm:$0xf]
    %v54 = vld [vmem:[#allocation5 + $0x8] sm:$0xf]
    %v55 = vld [vmem:[#allocation5 + $0xc] sm:$0xf]
    %v56 = vld [vmem:[#allocation5 + $0x10] sm:$0xf]
    %v57 = vld [vmem:[#allocation5 + $0x14] sm:$0xf]
    %v58 = vld [vmem:[#allocation5 + $0x18] sm:$0xf]
    %v59 = vld [vmem:[#allocation5 + $0x1c] sm:$0xf]
    %v60 = vld [vmem:[#allocation5 + $0x20] sm:$0xf]
    %v61 = vld [vmem:[#allocation5 + $0x24] sm:$0xf]
    %v62 = vld [vmem:[#allocation5 + $0x28] sm:$0xf]
    %v63 = vld [vmem:[#allocation5 + $0x2c] sm:$0xf]
    %v64 = vld [vmem:[#allocation5 + $0x30] sm:$0xf]
    %v65 = vld [vmem:[#allocation5 + $0x34] sm:$0xf]
    %v66 = vld [vmem:[#allocation5 + $0x38] sm:$0xf]
    %v67 = vld [vmem:[#allocation5 + $0x3c] sm:$0xf]
    %v76 = vunpack.c.l.b16 %v44
    %v77 = vunpack.c.l.b16 %v45
    %v78 = vunpack.c.l.b16 %v46
    %v79 = vunpack.c.l.b16 %v47
    %v80 = vunpack.c.l.b16 %v48
    %v81 = vunpack.c.l.b16 %v49
    %v82 = vunpack.c.l.b16 %v50
    %v83 = vunpack.c.l.b16 %v51
    %v84 = vpack.c.b16 %v77, %v76
    %v85 = vpack.c.b16 %v79, %v78
    %v86 = vpack.c.b16 %v81, %v80
    %v87 = vpack.c.b16 %v83, %v82
    %v108 = vunpack.c.l.b16 %v52
    %v109 = vunpack.c.l.b16 %v53
    %v110 = vunpack.c.l.b16 %v54
    %v111 = vunpack.c.l.b16 %v55
    %v112 = vunpack.c.l.b16 %v56
    %v113 = vunpack.c.l.b16 %v57
    %v114 = vunpack.c.l.b16 %v58
    %v115 = vunpack.c.l.b16 %v59
    %v116 = vunpack.c.l.b16 %v60
    %v117 = vunpack.c.l.b16 %v61
    %v118 = vunpack.c.l.b16 %v62
    %v119 = vunpack.c.l.b16 %v63
    %v120 = vunpack.c.l.b16 %v64
    %v121 = vunpack.c.l.b16 %v65
    %v122 = vunpack.c.l.b16 %v66
    %v123 = vunpack.c.l.b16 %v67
    %v124 = vpack.c.b16 %v109, %v108
    %v125 = vpack.c.b16 %v111, %v110
    %v126 = vpack.c.b16 %v113, %v112
    %v127 = vpack.c.b16 %v115, %v114
    %v128 = vpack.c.b16 %v117, %v116
    %v129 = vpack.c.b16 %v119, %v118
    %v130 = vpack.c.b16 %v121, %v120
    %v131 = vpack.c.b16 %v123, %v122
    %140 = vmatprep.subr.bf16.mxu0 0
    %141 = vmatpush1.bf16.msra.mxu0 %v124
    %142 = vmatprep.subr.bf16.mxu0 0
    %143 = vmatpush1.bf16.msra.mxu0 %v125
    %144 = vmatprep.subr.bf16.mxu0 0
    %145 = vmatpush1.bf16.msra.mxu0 %v126
    %146 = vmatprep.subr.bf16.mxu0 0
    %147 = vmatpush1.bf16.msra.mxu0 %v127
    %148 = vmatprep.subr.bf16.mxu0 0
    %149 = vmatpush1.bf16.msra.mxu0 %v128
    %150 = vmatprep.subr.bf16.mxu0 0
    %151 = vmatpush1.bf16.msra.mxu0 %v129
    %152 = vmatprep.subr.bf16.mxu0 0
    %153 = vmatpush1.bf16.msra.mxu0 %v130
    %154 = vmatprep.subr.bf16.mxu0 0
    %155 = vmatpush1.bf16.msra.mxu0 %v131
    %156 = vmatprep.subr.bf16.mxu0 0
    %157 = vmatpush1.bf16.msra.mxu0 0
    %158 = vmatprep.subr.bf16.mxu0 0
    %159 = vmatpush1.bf16.msra.mxu0 0
    %160 = vmatprep.subr.bf16.mxu0 0
    %161 = vmatpush1.bf16.msra.mxu0 0
    %162 = vmatprep.subr.bf16.mxu0 0
    %163 = vmatpush1.bf16.msra.mxu0 0
    %164 = vmatprep.subr.bf16.mxu0 0
    %165 = vmatpush1.bf16.msra.mxu0 0
    %166 = vmatprep.subr.bf16.mxu0 0
    %167 = vmatpush1.bf16.msra.mxu0 0
    %168 = vmatprep.subr.bf16.mxu0 0
    %169 = vmatpush1.bf16.msra.mxu0 0
    %170 = vmatprep.subr.bf16.mxu0 0
    %171 = vmatpush1.bf16.msra.mxu0 0
    %172 = vmatprep.mubr.bf16.mxu0 0
    %173 = vmatmul.mubr.bf16.gmra.mrb[0].mxu0 %v84
    %v174 = vpop.f32.mrb[0].mxu0
    %v175 = vadd.f32 0.0, %v174
    %v176 = vpop.f32.mrb[0].mxu0
    %v177 = vpop.f32.mrb[0].mxu0
    %v178 = vadd.f32 0.0, %v177
    %v179 = vpop.f32.mrb[0].mxu0
    %180 = vmatprep.mubr.bf16.mxu0 0
    %181 = vmatmul.mubr.bf16.gmra.mrb[0].mxu0 %v85
    %v182 = vpop.f32.mrb[0].mxu0
    %v183 = vadd.f32 0.0, %v182
    %v184 = vpop.f32.mrb[0].mxu0
    %v185 = vpop.f32.mrb[0].mxu0
    %v186 = vadd.f32 0.0, %v185
    %v187 = vpop.f32.mrb[0].mxu0
    %188 = vmatprep.mubr.bf16.mxu0 0
    %189 = vmatmul.mubr.bf16.gmra.mrb[0].mxu0 %v86
    %v190 = vpop.f32.mrb[0].mxu0
    %v191 = vadd.f32 0.0, %v190
    %v192 = vpop.f32.mrb[0].mxu0
    %v193 = vpop.f32.mrb[0].mxu0
    %v194 = vadd.f32 0.0, %v193
    %v195 = vpop.f32.mrb[0].mxu0
    %196 = vmatprep.mubr.bf16.mxu0 0
    %197 = vmatmul.mubr.bf16.gmra.mrb[0].mxu0 %v87
    %v198 = vpop.f32.mrb[0].mxu0
    %v199 = vadd.f32 0.0, %v198
    %v200 = vpop.f32.mrb[0].mxu0
    %v201 = vpop.f32.mrb[0].mxu0
    %v202 = vadd.f32 0.0, %v201
    %v203 = vpop.f32.mrb[0].mxu0
    %204 = vdwg.mxu0
    %v205 = vadd.f32 %v175, %v178
    %v206 = vadd.f32 %v205, %v183
    %v207 = vadd.f32 %v206, %v186
    %v208 = vadd.f32 %v207, %v191
    %v209 = vadd.f32 %v208, %v194
    %v210 = vadd.f32 %v209, %v199
    %v211 = vadd.f32 %v210, %v202
    %v212 = vrot.slane %v211, 4
    %v213 = vadd.f32 %v211, %v212
    %v214 = vrot.slane %v213, 2
    %v215 = vadd.f32 %v213, %v214
    %v216 = vrot.slane %v215, 1
    %v217 = vadd.f32 %v215, %v216
    %v218 = vmul.f32 %v217, 0.015625
    %v219 = vsub.f32 %v175, %v218
    %v220 = vsub.f32 %v178, %v218
    %v221 = vsub.f32 %v183, %v218
    %v222 = vsub.f32 %v186, %v218
    %v223 = vsub.f32 %v191, %v218
    %v224 = vsub.f32 %v194, %v218
    %v225 = vsub.f32 %v199, %v218
    %v226 = vsub.f32 %v202, %v218
    %227 = vst [vmem:[#allocation7] sm:$0x1] %v217
    %v228 = vmul.f32 %v219, %v219
    %v229 = vmul.f32 %v220, %v220
    %v230 = vmul.f32 %v221, %v221
    %v231 = vmul.f32 %v222, %v222
    %v232 = vmul.f32 %v223, %v223
    %v233 = vmul.f32 %v224, %v224
    %v234 = vmul.f32 %v225, %v225
    %v235 = vmul.f32 %v226, %v226
    %v236 = vadd.f32 %v228, %v229
    %v237 = vadd.f32 %v236, %v230
    %v238 = vadd.f32 %v237, %v231
    %v239 = vadd.f32 %v238, %v232
    %v240 = vadd.f32 %v239, %v233
    %v241 = vadd.f32 %v240, %v234
    %v242 = vadd.f32 %v241, %v235
    %v243 = vrot.slane %v242, 4
    %v244 = vadd.f32 %v242, %v243
    %v245 = vrot.slane %v244, 2
    %v246 = vadd.f32 %v244, %v245
    %v247 = vrot.slane %v246, 1
    %v248 = vadd.f32 %v246, %v247
    %249 = vst [vmem:[#allocation8] sm:$0x1] %v248
    // Predicated region
    $region18: #{tpu_custom_call.1} parent=1 // pred_check
      _
    $region19: #{tpu_custom_call.1} parent=1 // pred_check_branch
      %251 = sbr.rel (0) target = $region21
    $region20: #{tpu_custom_call.1} parent=1 // pred_region
      %s253 = ssub.s32 16, 16
      %254 = vsyncadd [#allocation4], %s253
      %s256 = sshll.u32 [#allocation7], 4
      %s257 = int_to_ptr.vmem [resolvable:$true] %s256
      %259 = dma.vmem_to_hbm [thread:$0]  %s257, 16, %s2, [#allocation4]
    $region21: #{tpu_custom_call.1} parent=1 // pred_fallthru
      _
    // Predicated region
    $region22: #{tpu_custom_call.1} parent=1 // pred_check
      _
    $region23: #{tpu_custom_call.1} parent=1 // pred_check_branch
      %261 = sbr.rel (0) target = $region25
    $region24: #{tpu_custom_call.1} parent=1 // pred_region
      %s263 = ssub.s32 16, 16
      %264 = vsyncadd [#allocation9], %s263
      %s266 = sshll.u32 [#allocation8], 4
      %s267 = int_to_ptr.vmem [resolvable:$true] %s266
      %269 = dma.vmem_to_hbm [thread:$0]  %s267, 16, %s3, [#allocation9]
    $region25: #{tpu_custom_call.1} parent=1 // pred_fallthru
      _
    // Predicated region
    $region26: #{tpu_custom_call.1} parent=1 // pred_check
      _
    $region27: #{tpu_custom_call.1} parent=1 // pred_check_branch
      %271 = sbr.rel (0) target = $region29
    $region28: #{tpu_custom_call.1} parent=1 // pred_region
      %272 = dma.done [#allocation4], 16
    $region29: #{tpu_custom_call.1} parent=1 // pred_fallthru
      _
    // Predicated region
    $region30: #{tpu_custom_call.1} parent=1 // pred_check
      _
    $region31: #{tpu_custom_call.1} parent=1 // pred_check_branch
      %274 = sbr.rel (0) target = $region33
    $region32: #{tpu_custom_call.1} parent=1 // pred_region
      %275 = dma.done [#allocation9], 16
    $region33: #{tpu_custom_call.1} parent=1 // pred_fallthru
      _
    %276 = vsyncpa [#allocation3], 1
    %277 = vsyncpa [#allocation6], 1
    %278 = vsyncpa [#allocation4], 1
    %279 = vsyncpa [#allocation9], 1

</llo_original>
